<compile_context>
chip_gen: v7x
topology: tpu7x:2x2x1
jax: 0.10.0
libtpu: 0.0.40
codegen_flags: <defaults>
</compile_context>

<pallas_src>
import functools

import jax
import jax.numpy as jnp
from jax.experimental import pallas as pl
from jax.experimental.pallas import tpu as pltpu


def _round_up(x, m):
    return ((x + m - 1) // m) * m


def _vmem_capacity_bytes():
    """Generation-aware VMEM capacity (64 MiB/TC on v7x, 128 MiB on v5e/v6e)."""
    try:
        return int(pltpu.get_tpu_info().vmem_capacity_bytes)
    except Exception:
        return 64 * 1024 * 1024  # conservative fallback (v7x per-TC size)


_VMEM_CAP = _vmem_capacity_bytes()


def _policy_kernel(x_ref, w1_ref, b1_ref, w2_ref, b2_ref, at_ref, s_ref):
    """One batch row-tile: X2 = W2(relu(W1 X + b1)) + b2 ; scores = X2 @ A.T.

    All three matmuls run on the MXU with f32 accumulation. Dropout(0.1) is the
    inference-mode identity (PyTorch eval semantics).
    """
    x = x_ref[...]                                                   # [tm, in] bf16
    h = jnp.dot(x, w1_ref[...], preferred_element_type=jnp.float32) + b1_ref[...]
    h = jnp.maximum(h, 0.0)                                          # ReLU
    # TODO(synk): training-mode dropout would need pltpu.prng_seed/prng_random_bits.
    x2 = jnp.dot(h.astype(x.dtype), w2_ref[...],
                 preferred_element_type=jnp.float32) + b2_ref[...]   # [tm, act] f32
    # Dense action scoring on the MXU against the transposed action table.
    scores = jnp.dot(x2.astype(x.dtype), at_ref[...],
                     preferred_element_type=jnp.float32)             # [tm, n_pad] f32
    s_ref[...] = scores.astype(s_ref.dtype)


def _step_vmem_bytes(tm, n_pad, input_dim, action_dim, in_isz, out_isz):
    """Per-step VMEM: double-buffered x/scores tiles + in-kernel intermediates."""
    x_t = tm * input_dim * in_isz
    s_t = tm * n_pad * out_isz
    # f32 h / x2, their bf16 casts, and the f32 scores before the output cast.
    interm = tm * action_dim * (4 + 4 + 2 * in_isz) + tm * n_pad * 4
    return 2 * (x_t + s_t) + interm


def _fit_block_m(tm, m8, n_pad, input_dim, action_dim, in_isz, out_isz, budget):
    """Largest 8-aligned row tile <= tm (and <= m8) whose working set fits budget."""
    tm = max(8, _round_up(min(tm, max(m8, 8)), 8))
    while tm > 8 and _step_vmem_bytes(tm, n_pad, input_dim, action_dim,
                                      in_isz, out_isz) > budget:
        tm = max(8, (tm // 2) // 8 * 8)
    return tm


@functools.partial(jax.jit, static_argnames=("block_m",))
def graph_search_policy_forward(params, e, q, H, actions, keys, *, block_m=None):
    """params: (ent_emb, rel_emb, W1[in,act], b1[act], W2[act,act], b2[act]).

    e, q: [B] int ids; H: [B, history_dim] (= path[-1][0][-1]);
    actions = (rs, es): [num_actions] int ids; keys: [B, Kmax] padded key ids.
    Returns scores [B, Kmax] (f32). Padded key slots alias key 0 — callers must
    slice/mask to each row's true key count before any softmax/argmax.
    """
    ent_emb, rel_emb, w1, b1, w2, b2 = params
    rs, es = actions

    input_dim = w1.shape[0]
    action_dim = w1.shape[1]

    # --- embedding gathers + concat (XLA side) ---
    Q = rel_emb[q]                                          # [B, relation_dim]
    E = ent_emb[e]                                          # [B, entity_dim]
    X = jnp.concatenate([E, H, Q], axis=-1)                 # [B, input_dim]
    A = jnp.concatenate([rel_emb[rs], ent_emb[es]], -1)     # [num_actions, action_dim]

    batch = X.shape[0]
    num_actions = A.shape[0]

    # bf16 operands (2x less HBM/VMEM, full-rate MXU); f32 accumulation in-kernel.
    cdt = jnp.bfloat16
    Xc = X.astype(cdt)
    w1c = w1.astype(cdt)
    w2c = w2.astype(cdt)
    A_Tc = A.T.astype(cdt)                                  # [action_dim, num_actions]
    b1f = b1.astype(jnp.float32).reshape(1, action_dim)
    b2f = b2.astype(jnp.float32).reshape(1, action_dim)

    in_isz = jnp.dtype(cdt).itemsize
    out_dtype = jnp.float32
    out_isz = jnp.dtype(out_dtype).itemsize

    # --- padding: lane-dense scores output + tiled, 8-aligned batch rows ---
    n_pad = _round_up(max(num_actions, 128), 128)
    m8 = _round_up(batch, 8)

    # Grid-invariant operands (weights, biases, action table) held in VMEM once.
    # TODO(synk): a very large action vocabulary would need its own grid axis
    # over n instead of a single grid-invariant A.T operand.
    w_bytes = ((w1c.size + w2c.size + action_dim * n_pad) * in_isz
               + (b1f.size + b2f.size) * 4)
    budget = max(4 * 1024 * 1024, _VMEM_CAP - (8 << 20) - w_bytes)

    if block_m is None:
        tm = _fit_block_m(512, m8, n_pad, input_dim, action_dim,
                          in_isz, out_isz, budget)
        if m8 >= 16:  # keep >=2 grid steps so both v7x TensorCores get work
            tm = min(tm, max(8, (m8 // 2) // 8 * 8))
    else:
        tm = _fit_block_m(block_m, m8, n_pad, input_dim, action_dim,
                          in_isz, out_isz, budget)
    m_pad = _round_up(batch, tm)

    X_p = jnp.pad(Xc, ((0, m_pad - batch), (0, 0)))
    A_T_p = jnp.pad(A_Tc, ((0, 0), (0, n_pad - num_actions)))

    grid = (m_pad // tm,)

    step_bytes = _step_vmem_bytes(tm, n_pad, input_dim, action_dim, in_isz, out_isz)
    vmem_limit = int(min(max(int(1.5 * (w_bytes + step_bytes)) + (4 << 20), 32 << 20),
                         _VMEM_CAP - (4 << 20)))

    cost = pl.CostEstimate(
        flops=2 * m_pad * action_dim * (input_dim + action_dim + n_pad),
        transcendentals=0,
        bytes_accessed=int(X_p.size * in_isz + w_bytes + m_pad * n_pad * out_isz),
    )

    dense = pl.pallas_call(
        _policy_kernel,
        out_shape=jax.ShapeDtypeStruct((m_pad, n_pad), out_dtype),
        grid_spec=pltpu.PrefetchScalarGridSpec(
            num_scalar_prefetch=0,
            grid=grid,
            in_specs=[
                # x row-tile: double-buffered against compute.
                pl.BlockSpec((tm, input_dim), lambda i: (i, 0)),
                # Grid-invariant weights / biases / action table: single-buffered.
                pl.BlockSpec((input_dim, action_dim), lambda i: (0, 0),
                             pipeline_mode=pl.Buffered(1)),
                pl.BlockSpec((1, action_dim), lambda i: (0, 0),
                             pipeline_mode=pl.Buffered(1)),
                pl.BlockSpec((action_dim, action_dim), lambda i: (0, 0),
                             pipeline_mode=pl.Buffered(1)),
                pl.BlockSpec((1, action_dim), lambda i: (0, 0),
                             pipeline_mode=pl.Buffered(1)),
                pl.BlockSpec((action_dim, n_pad), lambda i: (0, 0),
                             pipeline_mode=pl.Buffered(1)),
            ],
            out_specs=pl.BlockSpec((tm, n_pad), lambda i: (i, 0)),
        ),
        compiler_params=pltpu.CompilerParams(
            dimension_semantics=("parallel",),
            vmem_limit_bytes=vmem_limit,
        ),
        cost_estimate=cost,
    )(X_p, w1c, b1f, w2c, b2f, A_T_p)

    dense = dense[:batch, :num_actions]                     # [B, num_actions] f32
    # Ragged per-example key gather: cheap scalar gather in the wrapper.
    return jnp.take_along_axis(dense, keys.astype(jnp.int32), axis=1)  # [B, Kmax]


def init_params(key, num_entities, num_relations, entity_dim, relation_dim,
                history_dim, dtype=jnp.float32):
    """Embeddings N(0,1); W1/W2 Xavier-uniform (initialize_modules), stored (in, out)."""
    input_dim = entity_dim + history_dim + relation_dim
    action_dim = entity_dim + relation_dim
    ks = jax.random.split(key, 6)
    ent_emb = jax.random.normal(ks[0], (num_entities, entity_dim), dtype)
    rel_emb = jax.random.normal(ks[1], (num_relations, relation_dim), dtype)

    def xavier(k, fan_in, fan_out):
        bound = (6.0 / (fan_in + fan_out)) ** 0.5
        return jax.random.uniform(k, (fan_in, fan_out), dtype, -bound, bound)

    w1 = xavier(ks[2], input_dim, action_dim)
    w2 = xavier(ks[3], action_dim, action_dim)
    b1 = jax.random.uniform(ks[4], (action_dim,), dtype,
                            -1.0 / input_dim ** 0.5, 1.0 / input_dim ** 0.5)
    b2 = jax.random.uniform(ks[5], (action_dim,), dtype,
                            -1.0 / action_dim ** 0.5, 1.0 / action_dim ** 0.5)
    return ent_emb, rel_emb, w1, b1, w2, b2


if __name__ == "__main__":
    # Small, lane-friendly demo shapes (input_dim=256, action_dim=128).
    entity_dim, relation_dim, history_dim = 64, 64, 128
    num_entities, num_relations = 50, 20
    batch, num_actions = 2, 32

    key = jax.random.PRNGKey(0)
    kp, ke, kq, kh, kr, kes = jax.random.split(key, 6)
    params = init_params(kp, num_entities, num_relations,
                         entity_dim, relation_dim, history_dim)
    ent_emb, rel_emb, w1, b1, w2, b2 = params

    e = jax.random.randint(ke, (batch,), 0, num_entities)
    q = jax.random.randint(kq, (batch,), 0, num_relations)
    # H stands in for path[-1][0][-1] (top-layer hidden of the LSTM path encoder).
    # TODO(synk): the 3-layer nn.LSTM path_encoder (initialize_path/update_path)
    # is not invoked by forward()'s math here; it is not implemented as a kernel.
    H = jax.random.normal(kh, (batch, history_dim), jnp.float32)
    rs = jax.random.randint(kr, (num_actions,), 0, num_relations)
    es = jax.random.randint(kes, (num_actions,), 0, num_entities)

    # Ragged per-example action key sets, padded to Kmax (padded slots alias key 0
    # and are sliced away below).
    key_lists = [jnp.array([0, 3, 5, 7, 11], dtype=jnp.int32),
                 jnp.array([1, 2, 4, 8, 9, 13, 21, 30], dtype=jnp.int32)]
    kmax = max(len(k) for k in key_lists)
    keys = jnp.stack([jnp.pad(k, (0, kmax - len(k))) for k in key_lists])

    scores = graph_search_policy_forward(params, e, q, H, (rs, es), keys)
    scores = jax.block_until_ready(scores)
    assert scores.shape == (batch, kmax)

    # Pure-JAX reference mirroring the kernel's bf16-operand / f32-accumulate numerics.
    def bf(x):
        return x.astype(jnp.bfloat16).astype(jnp.float32)

    Q = rel_emb[q]
    E = ent_emb[e]
    X = jnp.concatenate([E, H, Q], axis=-1)
    A = jnp.concatenate([rel_emb[rs], ent_emb[es]], axis=-1)
    h_ref = jnp.maximum(bf(X) @ bf(w1) + b1, 0.0)
    x2_ref = bf(h_ref) @ bf(w2) + b2
    dense_ref = bf(x2_ref) @ bf(A).T
    for i, klist in enumerate(key_lists):
        pred_ref = dense_ref[i, klist]
        pred = scores[i, :len(klist)]
        assert jnp.allclose(pred, pred_ref, atol=2e-2, rtol=2e-3), (pred, pred_ref)

    print("KERNEL_OK")
</pallas_src>

<mosaic_0001>
module attributes {stable_mosaic.version = 11 : i64} {
  func.func @_policy_kernel(%arg0: i32, %arg1: memref<8x256xbf16, #tpu.memory_space<vmem>>, %arg2: memref<256x128xbf16, #tpu.memory_space<vmem>>, %arg3: memref<1x128xf32, #tpu.memory_space<vmem>>, %arg4: memref<128x128xbf16, #tpu.memory_space<vmem>>, %arg5: memref<1x128xf32, #tpu.memory_space<vmem>>, %arg6: memref<128x128xbf16, #tpu.memory_space<vmem>>, %arg7: memref<8x128xf32, #tpu.memory_space<vmem>>) attributes {dimension_semantics = [#tpu.dimension_semantics<parallel>], iteration_bounds = array<i64: 1>, scalar_prefetch = 0 : i64, scratch_operands = 0 : i64, tpu.core_type = #tpu.core_type<tc>, window_params = [{transform_indices = @transform_0, window_bounds = array<i64: 8, 256>}, {pipeline_mode = #tpu.pipeline_mode<synchronous>, transform_indices = @transform_1, window_bounds = array<i64: 256, 128>}, {pipeline_mode = #tpu.pipeline_mode<synchronous>, transform_indices = @transform_2, window_bounds = array<i64: 1, 128>}, {pipeline_mode = #tpu.pipeline_mode<synchronous>, transform_indices = @transform_3, window_bounds = array<i64: 128, 128>}, {pipeline_mode = #tpu.pipeline_mode<synchronous>, transform_indices = @transform_4, window_bounds = array<i64: 1, 128>}, {pipeline_mode = #tpu.pipeline_mode<synchronous>, transform_indices = @transform_5, window_bounds = array<i64: 128, 128>}, {transform_indices = @transform_6, window_bounds = array<i64: 8, 128>}]} {
    %c0 = arith.constant 0 : index
    %c0_0 = arith.constant 0 : index
    %0 = vector.load %arg1[%c0, %c0_0] : memref<8x256xbf16, #tpu.memory_space<vmem>>, vector<8x256xbf16>
    %c0_1 = arith.constant 0 : index
    %c0_2 = arith.constant 0 : index
    %1 = vector.load %arg2[%c0_1, %c0_2] : memref<256x128xbf16, #tpu.memory_space<vmem>>, vector<256x128xbf16>
    %cst = arith.constant dense<0.000000e+00> : vector<8x128xf32>
    %2 = tpu.matmul %0, %1, %cst {dimension_numbers = #tpu.dot_dimension_numbers<[1], [0], [0], [1], [0, 0, 1, 1], [], []>} : vector<8x256xbf16>, vector<256x128xbf16>, vector<8x128xf32> -> vector<8x128xf32>
    %c0_3 = arith.constant 0 : index
    %c0_4 = arith.constant 0 : index
    %3 = vector.load %arg3[%c0_3, %c0_4] : memref<1x128xf32, #tpu.memory_space<vmem>>, vector<1x128xf32>
    %4 = vector.broadcast %3 : vector<1x128xf32> to vector<8x128xf32>
    %5 = arith.addf %2, %4 : vector<8x128xf32>
    %cst_5 = arith.constant 0.000000e+00 : f32
    %6 = vector.broadcast %cst_5 : f32 to vector<8x128xf32>
    %7 = arith.maximumf %5, %6 : vector<8x128xf32>
    %8 = arith.truncf %7 : vector<8x128xf32> to vector<8x128xbf16>
    %c0_6 = arith.constant 0 : index
    %c0_7 = arith.constant 0 : index
    %9 = vector.load %arg4[%c0_6, %c0_7] : memref<128x128xbf16, #tpu.memory_space<vmem>>, vector<128x128xbf16>
    %cst_8 = arith.constant dense<0.000000e+00> : vector<8x128xf32>
    %10 = tpu.matmul %8, %9, %cst_8 {dimension_numbers = #tpu.dot_dimension_numbers<[1], [0], [0], [1], [0, 0, 1, 1], [], []>} : vector<8x128xbf16>, vector<128x128xbf16>, vector<8x128xf32> -> vector<8x128xf32>
    %c0_9 = arith.constant 0 : index
    %c0_10 = arith.constant 0 : index
    %11 = vector.load %arg5[%c0_9, %c0_10] : memref<1x128xf32, #tpu.memory_space<vmem>>, vector<1x128xf32>
    %12 = vector.broadcast %11 : vector<1x128xf32> to vector<8x128xf32>
    %13 = arith.addf %10, %12 : vector<8x128xf32>
    %14 = arith.truncf %13 : vector<8x128xf32> to vector<8x128xbf16>
    %c0_11 = arith.constant 0 : index
    %c0_12 = arith.constant 0 : index
    %15 = vector.load %arg6[%c0_11, %c0_12] : memref<128x128xbf16, #tpu.memory_space<vmem>>, vector<128x128xbf16>
    %cst_13 = arith.constant dense<0.000000e+00> : vector<8x128xf32>
    %16 = tpu.matmul %14, %15, %cst_13 {dimension_numbers = #tpu.dot_dimension_numbers<[1], [0], [0], [1], [0, 0, 1, 1], [], []>} : vector<8x128xbf16>, vector<128x128xbf16>, vector<8x128xf32> -> vector<8x128xf32>
    %c0_14 = arith.constant 0 : index
    %c0_15 = arith.constant 0 : index
    %17 = vector.load %arg7[%c0_14, %c0_15] : memref<8x128xf32, #tpu.memory_space<vmem>>, vector<8x128xf32>
    tpu.vector_store %arg7[%c0_14, %c0_15], %16 {strides = array<i32>} : memref<8x128xf32, #tpu.memory_space<vmem>>, vector<8x128xf32>,
    return
  }
  func.func @transform_0(%arg0: i32) -> (i32, i32) {
    %c0_i32 = arith.constant 0 : i32
    %c0_i32_0 = arith.constant 0 : i32
    return %arg0, %c0_i32 : i32, i32
  }
  func.func @transform_1(%arg0: i32) -> (i32, i32) {
    %c0_i32 = arith.constant 0 : i32
    %c0_i32_0 = arith.constant 0 : i32
    %c0_i32_1 = arith.constant 0 : i32
    return %c0_i32, %c0_i32_0 : i32, i32
  }
  func.func @transform_2(%arg0: i32) -> (i32, i32) {
    %c0_i32 = arith.constant 0 : i32
    %c0_i32_0 = arith.constant 0 : i32
    %c0_i32_1 = arith.constant 0 : i32
    return %c0_i32, %c0_i32_0 : i32, i32
  }
  func.func @transform_3(%arg0: i32) -> (i32, i32) {
    %c0_i32 = arith.constant 0 : i32
    %c0_i32_0 = arith.constant 0 : i32
    %c0_i32_1 = arith.constant 0 : i32
    return %c0_i32, %c0_i32_0 : i32, i32
  }
  func.func @transform_4(%arg0: i32) -> (i32, i32) {
    %c0_i32 = arith.constant 0 : i32
    %c0_i32_0 = arith.constant 0 : i32
    %c0_i32_1 = arith.constant 0 : i32
    return %c0_i32, %c0_i32_0 : i32, i32
  }
  func.func @transform_5(%arg0: i32) -> (i32, i32) {
    %c0_i32 = arith.constant 0 : i32
    %c0_i32_0 = arith.constant 0 : i32
    %c0_i32_1 = arith.constant 0 : i32
    return %c0_i32, %c0_i32_0 : i32, i32
  }
  func.func @transform_6(%arg0: i32) -> (i32, i32) {
    %c0_i32 = arith.constant 0 : i32
    %c0_i32_0 = arith.constant 0 : i32
    return %arg0, %c0_i32 : i32, i32
  }
}

</mosaic_0001>

<llo_original>
// kernel: graph_search_policy_forward.1
$region0: #{graph_search_policy_forward.1}
  #allocation0 [shape = 'u32[]', space=smem, size = 0x4, offset = 0x4, fixed_abs, tag = 'smem constant byte address 0x4 - core index']
  #allocation1 [shape = 'u32[144,128]{1,0:T(1,128)}', space=vmem, size = 0x12000, scoped, tag = 'internal scratch']
  %s0 = inlined_call_operand.vmem [shape: bf16[8,256], index: 0, kind: input, shape index: {}]
  %s1 = inlined_call_operand.vmem [shape: bf16[256,128], index: 1, kind: input, shape index: {}]
  %s2 = inlined_call_operand.vmem [shape: f32[1,128], index: 2, kind: input, shape index: {}]
  %s3 = inlined_call_operand.vmem [shape: bf16[128,128], index: 3, kind: input, shape index: {}]
  %s4 = inlined_call_operand.vmem [shape: f32[1,128], index: 4, kind: input, shape index: {}]
  %s5 = inlined_call_operand.vmem [shape: bf16[128,128], index: 5, kind: input, shape index: {}]
  %s6 = inlined_call_operand.vmem [shape: f32[8,128], index: 6, kind: output, shape index: {}]
  %s7 = sld [smem:[#allocation0]]
  $region34: #{graph_search_policy_forward.1} parent=0
    _
  %s9 = ssub.s32 1, %s7
  %s10 = scalar_select 0, %s9, %s7
  // Predicated region
  $region2: #{graph_search_policy_forward.1} parent=0 // pred_check
    _
  $region3: #{graph_search_policy_forward.1} parent=0 // pred_check_branch
    %12 = sbr.rel (0) target = $region5
  $region4: #{graph_search_policy_forward.1} parent=0 // pred_region
    _
  $region5: #{graph_search_policy_forward.1} parent=0 // pred_fallthru
    _
  // Predicated region
  $region6: #{graph_search_policy_forward.1} parent=0 // pred_check
    _
  $region7: #{graph_search_policy_forward.1} parent=0 // pred_check_branch
    %14 = sbr.rel (0) target = $region9
  $region8: #{graph_search_policy_forward.1} parent=0 // pred_region
    _
  $region9: #{graph_search_policy_forward.1} parent=0 // pred_fallthru
    _
  // Predicated region
  $region10: #{graph_search_policy_forward.1} parent=0 // pred_check
    _
  $region11: #{graph_search_policy_forward.1} parent=0 // pred_check_branch
    %16 = sbr.rel (0) target = $region13
  $region12: #{graph_search_policy_forward.1} parent=0 // pred_region
    _
  $region13: #{graph_search_policy_forward.1} parent=0 // pred_fallthru
    _
  // Predicated region
  $region14: #{graph_search_policy_forward.1} parent=0 // pred_check
    _
  $region15: #{graph_search_policy_forward.1} parent=0 // pred_check_branch
    %18 = sbr.rel (0) target = $region17
  $region16: #{graph_search_policy_forward.1} parent=0 // pred_region
    _
  $region17: #{graph_search_policy_forward.1} parent=0 // pred_fallthru
    _
  // Predicated region
  $region18: #{graph_search_policy_forward.1} parent=0 // pred_check
    _
  $region19: #{graph_search_policy_forward.1} parent=0 // pred_check_branch
    %20 = sbr.rel (0) target = $region21
  $region20: #{graph_search_policy_forward.1} parent=0 // pred_region
    _
  $region21: #{graph_search_policy_forward.1} parent=0 // pred_fallthru
    _
  // Predicated region
  $region22: #{graph_search_policy_forward.1} parent=0 // pred_check
    _
  $region23: #{graph_search_policy_forward.1} parent=0 // pred_check_branch
    %22 = sbr.rel (0) target = $region25
  $region24: #{graph_search_policy_forward.1} parent=0 // pred_region
    _
  $region25: #{graph_search_policy_forward.1} parent=0 // pred_fallthru
    _
  %v24 = vld [vmem:[%s0] sm:$0xff]
  %v25 = vld [vmem:[%s1] sm:$0xf]
  %v26 = vld [vmem:[%s1 + $0x4] sm:$0xf]
  %v27 = vld [vmem:[%s1 + $0x8] sm:$0xf]
  %v28 = vld [vmem:[%s1 + $0xc] sm:$0xf]
  %v29 = vld [vmem:[%s1 + $0x10] sm:$0xf]
  %v30 = vld [vmem:[%s1 + $0x14] sm:$0xf]
  %v31 = vld [vmem:[%s1 + $0x18] sm:$0xf]
  %v32 = vld [vmem:[%s1 + $0x1c] sm:$0xf]
  %v33 = vld [vmem:[%s1 + $0x20] sm:$0xf]
  %v34 = vld [vmem:[%s1 + $0x24] sm:$0xf]
  %v35 = vld [vmem:[%s1 + $0x28] sm:$0xf]
  %v36 = vld [vmem:[%s1 + $0x2c] sm:$0xf]
  %v37 = vld [vmem:[%s1 + $0x30] sm:$0xf]
  %v38 = vld [vmem:[%s1 + $0x34] sm:$0xf]
  %v39 = vld [vmem:[%s1 + $0x38] sm:$0xf]
  %v40 = vld [vmem:[%s1 + $0x3c] sm:$0xf]
  %v41 = vld [vmem:[%s1 + $0x40] sm:$0xf]
  %v42 = vld [vmem:[%s1 + $0x44] sm:$0xf]
  %v43 = vld [vmem:[%s1 + $0x48] sm:$0xf]
  %v44 = vld [vmem:[%s1 + $0x4c] sm:$0xf]
  %v45 = vld [vmem:[%s1 + $0x50] sm:$0xf]
  %v46 = vld [vmem:[%s1 + $0x54] sm:$0xf]
  %v47 = vld [vmem:[%s1 + $0x58] sm:$0xf]
  %v48 = vld [vmem:[%s1 + $0x5c] sm:$0xf]
  %v49 = vld [vmem:[%s1 + $0x60] sm:$0xf]
  %v50 = vld [vmem:[%s1 + $0x64] sm:$0xf]
  %v51 = vld [vmem:[%s1 + $0x68] sm:$0xf]
  %v52 = vld [vmem:[%s1 + $0x6c] sm:$0xf]
  %v53 = vld [vmem:[%s1 + $0x70] sm:$0xf]
  %v54 = vld [vmem:[%s1 + $0x74] sm:$0xf]
  %v55 = vld [vmem:[%s1 + $0x78] sm:$0xf]
  %v56 = vld [vmem:[%s1 + $0x7c] sm:$0xf]
  %v57 = vld [vmem:[%s2] sm:$0x1]
  %v59 = vlaneseq
  %v60 = vshrl.u32 %v59, 7
  %v61 = vsub.s32 0, %v60
  %v62 = vrot.slane %v57, %v61
  %v65 = vunpack.c.l.b16 %v24
  %v66 = vunpack.c.h.b16 %v24
  %v67 = vpack.c.b16 %v65, %v65
  %v68 = vpack.c.b16 %v66, %v66
  %v103 = vunpack.c.l.b16 %v25
  %v104 = vunpack.c.l.b16 %v26
  %v105 = vunpack.c.l.b16 %v27
  %v106 = vunpack.c.l.b16 %v28
  %v107 = vunpack.c.l.b16 %v29
  %v108 = vunpack.c.l.b16 %v30
  %v109 = vunpack.c.l.b16 %v31
  %v110 = vunpack.c.l.b16 %v32
  %v111 = vunpack.c.l.b16 %v33
  %v112 = vunpack.c.l.b16 %v34
  %v113 = vunpack.c.l.b16 %v35
  %v114 = vunpack.c.l.b16 %v36
  %v115 = vunpack.c.l.b16 %v37
  %v116 = vunpack.c.l.b16 %v38
  %v117 = vunpack.c.l.b16 %v39
  %v118 = vunpack.c.l.b16 %v40
  %v119 = vunpack.c.l.b16 %v41
  %v120 = vunpack.c.l.b16 %v42
  %v121 = vunpack.c.l.b16 %v43
  %v122 = vunpack.c.l.b16 %v44
  %v123 = vunpack.c.l.b16 %v45
  %v124 = vunpack.c.l.b16 %v46
  %v125 = vunpack.c.l.b16 %v47
  %v126 = vunpack.c.l.b16 %v48
  %v127 = vunpack.c.l.b16 %v49
  %v128 = vunpack.c.l.b16 %v50
  %v129 = vunpack.c.l.b16 %v51
  %v130 = vunpack.c.l.b16 %v52
  %v131 = vunpack.c.l.b16 %v53
  %v132 = vunpack.c.l.b16 %v54
  %v133 = vunpack.c.l.b16 %v55
  %v134 = vunpack.c.l.b16 %v56
  %v135 = vpack.c.b16 %v104, %v103
  %v136 = vpack.c.b16 %v106, %v105
  %v137 = vpack.c.b16 %v108, %v107
  %v138 = vpack.c.b16 %v110, %v109
  %v139 = vpack.c.b16 %v112, %v111
  %v140 = vpack.c.b16 %v114, %v113
  %v141 = vpack.c.b16 %v116, %v115
  %v142 = vpack.c.b16 %v118, %v117
  %v143 = vpack.c.b16 %v120, %v119
  %v144 = vpack.c.b16 %v122, %v121
  %v145 = vpack.c.b16 %v124, %v123
  %v146 = vpack.c.b16 %v126, %v125
  %v147 = vpack.c.b16 %v128, %v127
  %v148 = vpack.c.b16 %v130, %v129
  %v149 = vpack.c.b16 %v132, %v131
  %v150 = vpack.c.b16 %v134, %v133
  %167 = vmatprep.subr.bf16.mxu0 0
  %168 = vmatpush1.bf16.msra.mxu0 %v135
  %169 = vmatprep.subr.bf16.mxu0 0
  %170 = vmatpush1.bf16.msra.mxu0 %v136
  %171 = vmatprep.subr.bf16.mxu0 0
  %172 = vmatpush1.bf16.msra.mxu0 %v137
  %173 = vmatprep.subr.bf16.mxu0 0
  %174 = vmatpush1.bf16.msra.mxu0 %v138
  %175 = vmatprep.subr.bf16.mxu0 0
  %176 = vmatpush1.bf16.msra.mxu0 %v139
  %177 = vmatprep.subr.bf16.mxu0 0
  %178 = vmatpush1.bf16.msra.mxu0 %v140
  %179 = vmatprep.subr.bf16.mxu0 0
  %180 = vmatpush1.bf16.msra.mxu0 %v141
  %181 = vmatprep.subr.bf16.mxu0 0
  %182 = vmatpush1.bf16.msra.mxu0 %v142
  %183 = vmatprep.subr.bf16.mxu0 0
  %184 = vmatpush1.bf16.msra.mxu0 %v143
  %185 = vmatprep.subr.bf16.mxu0 0
  %186 = vmatpush1.bf16.msra.mxu0 %v144
  %187 = vmatprep.subr.bf16.mxu0 0
  %188 = vmatpush1.bf16.msra.mxu0 %v145
  %189 = vmatprep.subr.bf16.mxu0 0
  %190 = vmatpush1.bf16.msra.mxu0 %v146
  %191 = vmatprep.subr.bf16.mxu0 0
  %192 = vmatpush1.bf16.msra.mxu0 %v147
  %193 = vmatprep.subr.bf16.mxu0 0
  %194 = vmatpush1.bf16.msra.mxu0 %v148
  %195 = vmatprep.subr.bf16.mxu0 0
  %196 = vmatpush1.bf16.msra.mxu0 %v149
  %197 = vmatprep.subr.bf16.mxu0 0
  %198 = vmatpush1.bf16.msra.mxu0 %v150
  %199 = vmatprep.mubr.bf16.mxu0 %v68
  %200 = vmatmul.mubr.bf16.gmra.mrb[0].mxu0 %v67
  %v201 = vpop.f32.mrb[0].mxu0
  %v202 = vadd.f32 %v62, %v201
  %v203 = vpop.f32.mrb[0].mxu0
  %v204 = vpop.f32.mrb[0].mxu0
  %v205 = vpop.f32.mrb[0].mxu0
  %206 = vdwg.mxu0
  %v207 = vmax.f32 %v202, 0.0
  %v208 = vpack.c.bf16 %v207, %v207
  %v209 = vld [vmem:[%s3] sm:$0xf]
  %v210 = vld [vmem:[%s3 + $0x4] sm:$0xf]
  %v211 = vld [vmem:[%s3 + $0x8] sm:$0xf]
  %v212 = vld [vmem:[%s3 + $0xc] sm:$0xf]
  %v213 = vld [vmem:[%s3 + $0x10] sm:$0xf]
  %v214 = vld [vmem:[%s3 + $0x14] sm:$0xf]
  %v215 = vld [vmem:[%s3 + $0x18] sm:$0xf]
  %v216 = vld [vmem:[%s3 + $0x1c] sm:$0xf]
  %v217 = vld [vmem:[%s3 + $0x20] sm:$0xf]
  %v218 = vld [vmem:[%s3 + $0x24] sm:$0xf]
  %v219 = vld [vmem:[%s3 + $0x28] sm:$0xf]
  %v220 = vld [vmem:[%s3 + $0x2c] sm:$0xf]
  %v221 = vld [vmem:[%s3 + $0x30] sm:$0xf]
  %v222 = vld [vmem:[%s3 + $0x34] sm:$0xf]
  %v223 = vld [vmem:[%s3 + $0x38] sm:$0xf]
  %v224 = vld [vmem:[%s3 + $0x3c] sm:$0xf]
  %v225 = vld [vmem:[%s4] sm:$0x1]
  %v227 = vlaneseq
  %v228 = vshrl.u32 %v227, 7
  %v229 = vsub.s32 0, %v228
  %v230 = vrot.slane %v225, %v229
  %v248 = vunpack.c.l.b16 %v209
  %v249 = vunpack.c.l.b16 %v210
  %v250 = vunpack.c.l.b16 %v211
  %v251 = vunpack.c.l.b16 %v212
  %v252 = vunpack.c.l.b16 %v213
  %v253 = vunpack.c.l.b16 %v214
  %v254 = vunpack.c.l.b16 %v215
  %v255 = vunpack.c.l.b16 %v216
  %v256 = vunpack.c.l.b16 %v217
  %v257 = vunpack.c.l.b16 %v218
  %v258 = vunpack.c.l.b16 %v219
  %v259 = vunpack.c.l.b16 %v220
  %v260 = vunpack.c.l.b16 %v221
  %v261 = vunpack.c.l.b16 %v222
  %v262 = vunpack.c.l.b16 %v223
  %v263 = vunpack.c.l.b16 %v224
  %v264 = vpack.c.b16 %v249, %v248
  %v265 = vpack.c.b16 %v251, %v250
  %v266 = vpack.c.b16 %v253, %v252
  %v267 = vpack.c.b16 %v255, %v254
  %v268 = vpack.c.b16 %v257, %v256
  %v269 = vpack.c.b16 %v259, %v258
  %v270 = vpack.c.b16 %v261, %v260
  %v271 = vpack.c.b16 %v263, %v262
  %280 = vmatprep.subr.bf16.mxu0 0
  %281 = vmatpush1.bf16.msra.mxu0 %v264
  %282 = vmatprep.subr.bf16.mxu0 0
  %283 = vmatpush1.bf16.msra.mxu0 %v265
  %284 = vmatprep.subr.bf16.mxu0 0
  %285 = vmatpush1.bf16.msra.mxu0 %v266
  %286 = vmatprep.subr.bf16.mxu0 0
  %287 = vmatpush1.bf16.msra.mxu0 %v267
  %288 = vmatprep.subr.bf16.mxu0 0
  %289 = vmatpush1.bf16.msra.mxu0 %v268
  %290 = vmatprep.subr.bf16.mxu0 0
  %291 = vmatpush1.bf16.msra.mxu0 %v269
  %292 = vmatprep.subr.bf16.mxu0 0
  %293 = vmatpush1.bf16.msra.mxu0 %v270
  %294 = vmatprep.subr.bf16.mxu0 0
  %295 = vmatpush1.bf16.msra.mxu0 %v271
  %296 = vmatprep.subr.bf16.mxu0 0
  %297 = vmatpush1.bf16.msra.mxu0 0
  %298 = vmatprep.subr.bf16.mxu0 0
  %299 = vmatpush1.bf16.msra.mxu0 0
  %300 = vmatprep.subr.bf16.mxu0 0
  %301 = vmatpush1.bf16.msra.mxu0 0
  %302 = vmatprep.subr.bf16.mxu0 0
  %303 = vmatpush1.bf16.msra.mxu0 0
  %304 = vmatprep.subr.bf16.mxu0 0
  %305 = vmatpush1.bf16.msra.mxu0 0
  %306 = vmatprep.subr.bf16.mxu0 0
  %307 = vmatpush1.bf16.msra.mxu0 0
  %308 = vmatprep.subr.bf16.mxu0 0
  %309 = vmatpush1.bf16.msra.mxu0 0
  %310 = vmatprep.subr.bf16.mxu0 0
  %311 = vmatpush1.bf16.msra.mxu0 0
  %312 = vmatprep.mubr.bf16.mxu0 0
  %313 = vmatmul.mubr.bf16.gmra.mrb[0].mxu0 %v208
  %v314 = vpop.f32.mrb[0].mxu0
  %v315 = vadd.f32 %v230, %v314
  %v316 = vpop.f32.mrb[0].mxu0
  %v317 = vpop.f32.mrb[0].mxu0
  %v318 = vpop.f32.mrb[0].mxu0
  %319 = vdwg.mxu0
  %v320 = vpack.c.bf16 %v315, %v315
  %v321 = vld [vmem:[%s5] sm:$0xf]
  %v322 = vld [vmem:[%s5 + $0x4] sm:$0xf]
  %v323 = vld [vmem:[%s5 + $0x8] sm:$0xf]
  %v324 = vld [vmem:[%s5 + $0xc] sm:$0xf]
  %v325 = vld [vmem:[%s5 + $0x10] sm:$0xf]
  %v326 = vld [vmem:[%s5 + $0x14] sm:$0xf]
  %v327 = vld [vmem:[%s5 + $0x18] sm:$0xf]
  %v328 = vld [vmem:[%s5 + $0x1c] sm:$0xf]
  %v329 = vld [vmem:[%s5 + $0x20] sm:$0xf]
  %v330 = vld [vmem:[%s5 + $0x24] sm:$0xf]
  %v331 = vld [vmem:[%s5 + $0x28] sm:$0xf]
  %v332 = vld [vmem:[%s5 + $0x2c] sm:$0xf]
  %v333 = vld [vmem:[%s5 + $0x30] sm:$0xf]
  %v334 = vld [vmem:[%s5 + $0x34] sm:$0xf]
  %v335 = vld [vmem:[%s5 + $0x38] sm:$0xf]
  %v336 = vld [vmem:[%s5 + $0x3c] sm:$0xf]
  %v353 = vunpack.c.l.b16 %v321
  %v354 = vunpack.c.l.b16 %v322
  %v355 = vunpack.c.l.b16 %v323
  %v356 = vunpack.c.l.b16 %v324
  %v357 = vunpack.c.l.b16 %v325
  %v358 = vunpack.c.l.b16 %v326
  %v359 = vunpack.c.l.b16 %v327
  %v360 = vunpack.c.l.b16 %v328
  %v361 = vunpack.c.l.b16 %v329
  %v362 = vunpack.c.l.b16 %v330
  %v363 = vunpack.c.l.b16 %v331
  %v364 = vunpack.c.l.b16 %v332
  %v365 = vunpack.c.l.b16 %v333
  %v366 = vunpack.c.l.b16 %v334
  %v367 = vunpack.c.l.b16 %v335
  %v368 = vunpack.c.l.b16 %v336
  %v369 = vpack.c.b16 %v354, %v353
  %v370 = vpack.c.b16 %v356, %v355
  %v371 = vpack.c.b16 %v358, %v357
  %v372 = vpack.c.b16 %v360, %v359
  %v373 = vpack.c.b16 %v362, %v361
  %v374 = vpack.c.b16 %v364, %v363
  %v375 = vpack.c.b16 %v366, %v365
  %v376 = vpack.c.b16 %v368, %v367
  %385 = vmatprep.subr.bf16.mxu0 0
  %386 = vmatpush1.bf16.msra.mxu0 %v369
  %387 = vmatprep.subr.bf16.mxu0 0
  %388 = vmatpush1.bf16.msra.mxu0 %v370
  %389 = vmatprep.subr.bf16.mxu0 0
  %390 = vmatpush1.bf16.msra.mxu0 %v371
  %391 = vmatprep.subr.bf16.mxu0 0
  %392 = vmatpush1.bf16.msra.mxu0 %v372
  %393 = vmatprep.subr.bf16.mxu0 0
  %394 = vmatpush1.bf16.msra.mxu0 %v373
  %395 = vmatprep.subr.bf16.mxu0 0
  %396 = vmatpush1.bf16.msra.mxu0 %v374
  %397 = vmatprep.subr.bf16.mxu0 0
  %398 = vmatpush1.bf16.msra.mxu0 %v375
  %399 = vmatprep.subr.bf16.mxu0 0
  %400 = vmatpush1.bf16.msra.mxu0 %v376
  %401 = vmatprep.subr.bf16.mxu0 0
  %402 = vmatpush1.bf16.msra.mxu0 0
  %403 = vmatprep.subr.bf16.mxu0 0
  %404 = vmatpush1.bf16.msra.mxu0 0
  %405 = vmatprep.subr.bf16.mxu0 0
  %406 = vmatpush1.bf16.msra.mxu0 0
  %407 = vmatprep.subr.bf16.mxu0 0
  %408 = vmatpush1.bf16.msra.mxu0 0
  %409 = vmatprep.subr.bf16.mxu0 0
  %410 = vmatpush1.bf16.msra.mxu0 0
  %411 = vmatprep.subr.bf16.mxu0 0
  %412 = vmatpush1.bf16.msra.mxu0 0
  %413 = vmatprep.subr.bf16.mxu0 0
  %414 = vmatpush1.bf16.msra.mxu0 0
  %415 = vmatprep.subr.bf16.mxu0 0
  %416 = vmatpush1.bf16.msra.mxu0 0
  %417 = vmatprep.mubr.bf16.mxu0 0
  %418 = vmatmul.mubr.bf16.gmra.mrb[0].mxu0 %v320
  %v419 = vpop.f32.mrb[0].mxu0
  %v420 = vadd.f32 0.0, %v419
  %v421 = vpop.f32.mrb[0].mxu0
  %v422 = vpop.f32.mrb[0].mxu0
  %v423 = vpop.f32.mrb[0].mxu0
  %424 = vdwg.mxu0
  %425 = vst [vmem:[%s6] sm:$0xff] %v420
  // Predicated region
  $region26: #{graph_search_policy_forward.1} parent=0 // pred_check
    _
  $region27: #{graph_search_policy_forward.1} parent=0 // pred_check_branch
    %427 = sbr.rel (0) target = $region29
  $region28: #{graph_search_policy_forward.1} parent=0 // pred_region
    _
  $region29: #{graph_search_policy_forward.1} parent=0 // pred_fallthru
    _
  // Predicated region
  $region30: #{graph_search_policy_forward.1} parent=0 // pred_check
    _
  $region31: #{graph_search_policy_forward.1} parent=0 // pred_check_branch
    %429 = sbr.rel (0) target = $region33
  $region32: #{graph_search_policy_forward.1} parent=0 // pred_region
    _
  $region33: #{graph_search_policy_forward.1} parent=0 // pred_fallthru
    _

</llo_original>
